<compile_context>
chip_gen: v6e
topology: v6e:2x2x1
jax: 0.10.0
libtpu: 0.0.40
codegen_flags: <defaults>
</compile_context>

<pallas_src>
import jax
import jax.numpy as jnp
from jax.experimental import pallas as pl
from jax.experimental.pallas import tpu as pltpu


def _outconv_kernel(x_ref, w_ref, b_ref, o_ref):
    # x_ref: (R_in, TS)  w_ref: (R_out, R_in)  b_ref: (R_out, 1)  o_ref: (R_out, TS)
    acc = jnp.dot(w_ref[...], x_ref[...], preferred_element_type=jnp.float32)
    o_ref[...] = (acc + b_ref[...]).astype(o_ref.dtype)


def _round_down_128(v):
    return max(128, (int(v) // 128) * 128)


def _clamp_tile(ts, hw):
    # Tiny images: one block equal to the full pixel axis (legal: equals dim).
    if hw <= 128:
        return hw
    return max(128, min(ts, (hw // 128) * 128))


def _pick_tile(hw, rows_in, rows_out, itemsize, batch_steps, budget_bytes=8 << 20):
    """Largest lane tile whose double-buffered in+out footprint fits the budget."""
    per_lane = 2 * (rows_in + rows_out) * itemsize      # 2 pipeline buffers each
    ts = _clamp_tile(_round_down_128(budget_bytes // per_lane), hw)
    # Keep >=2 total grid steps so the v7x megacore can feed both TensorCores
    # (no-op on single-TC v5e/v6e and for tiny images).
    while ts > 256 and batch_steps * pl.cdiv(hw, ts) < 2:
        ts = _round_down_128(ts // 2)
    return ts


def out_conv(x_nchw, weight, bias, *, tile_hw=None):
    """1x1 convolution, PyTorch nn.Conv2d(kernel_size=1) semantics.

    x_nchw: (N, Cin, H, W); weight: (Cout, Cin) or (Cout, Cin, 1, 1);
    bias: (Cout,).  Returns (N, Cout, H, W) in x's dtype.
    """
    if weight.ndim == 4:
        weight = weight.reshape(weight.shape[0], weight.shape[1])
    N, Cin, H, W = x_nchw.shape
    Cout = weight.shape[0]
    HW = H * W
    dtype = x_nchw.dtype
    itemsize = jnp.dtype(dtype).itemsize
    weight = weight.astype(dtype)
    bias_f32 = bias.astype(jnp.float32)

    # Sublane height per dtype (f32: 8, bf16: 16, int8/fp8: 32).
    min_sublane = {4: 8, 2: 16, 1: 32}.get(itemsize, 8)
    fold_batch = ((Cin < min_sublane or Cout < min_sublane)
                  and N * Cin <= 512 and N * Cout <= 512)

    if fold_batch:
        # (N, Cin, H, W) -> (N*Cin, HW): free row-major reshape, no transpose.
        x_rows = x_nchw.reshape(N * Cin, HW)
        # Tiny block-diagonal weight: y[n*Cout:(n+1)*Cout] = W @ x[n*Cin:(n+1)*Cin].
        w_mat = jnp.kron(jnp.eye(N, dtype=dtype), weight)        # (N*Cout, N*Cin)
        b_col = jnp.tile(bias_f32, N).reshape(N * Cout, 1)
        rows_in, rows_out = N * Cin, N * Cout
        batch_steps = 1
    else:
        x_rows = x_nchw.reshape(N, Cin, HW)
        w_mat = weight
        b_col = bias_f32.reshape(Cout, 1)
        rows_in, rows_out = Cin, Cout
        batch_steps = N

    if tile_hw is not None:
        # Round to lane granularity; the cdiv grid below guarantees a
        # non-dividing user tile can never silently drop trailing pixels.
        TS = _clamp_tile(_round_down_128(tile_hw), HW)
    else:
        TS = _pick_tile(HW, rows_in, rows_out, itemsize, batch_steps)

    num_t = pl.cdiv(HW, TS)

    # Advisory cost estimate: dtype-aware, weights/bias counted once.
    cost = pl.CostEstimate(
        flops=2 * N * HW * Cin * Cout,
        transcendentals=0,
        bytes_accessed=itemsize * N * HW * (Cin + Cout)
        + itemsize * Cin * Cout + 4 * Cout)

    if fold_batch:
        grid = (num_t,)
        in_specs = [
            pl.BlockSpec((rows_in, TS), lambda t: (0, t)),
            pl.BlockSpec((rows_out, rows_in), lambda t: (0, 0)),
            pl.BlockSpec((rows_out, 1), lambda t: (0, 0)),
        ]
        out_specs = pl.BlockSpec((rows_out, TS), lambda t: (0, t))
        out_shape = jax.ShapeDtypeStruct((rows_out, HW), dtype)
        dim_sem = ("parallel",)
    else:
        grid = (N, num_t)
        in_specs = [
            pl.BlockSpec((None, Cin, TS), lambda n, t: (n, 0, t)),
            pl.BlockSpec((Cout, Cin), lambda n, t: (0, 0)),
            pl.BlockSpec((Cout, 1), lambda n, t: (0, 0)),
        ]
        out_specs = pl.BlockSpec((None, Cout, TS), lambda n, t: (n, 0, t))
        out_shape = jax.ShapeDtypeStruct((N, Cout, HW), dtype)
        dim_sem = ("parallel", "parallel")

    out = pl.pallas_call(
        _outconv_kernel,
        out_shape=out_shape,
        grid_spec=pltpu.PrefetchScalarGridSpec(
            num_scalar_prefetch=0,
            grid=grid,
            in_specs=in_specs,
            out_specs=out_specs,
        ),
        compiler_params=pltpu.CompilerParams(dimension_semantics=dim_sem),
        cost_estimate=cost,
    )(x_rows, w_mat, b_col)

    return out.reshape(N, Cout, H, W)


if __name__ == "__main__":
    key = jax.random.PRNGKey(0)
    k_x, k_w, k_b, k_x2, k_w2, k_b2 = jax.random.split(key, 6)

    # --- Small-channel case (exercises the folded, block-diagonal path). ---
    N, Cin, Cout, S = 2, 4, 3, 16
    x = jax.random.normal(k_x, (N, Cin, S, S), dtype=jnp.float32)
    bound = 1.0 / (Cin ** 0.5)   # PyTorch Conv2d default init range
    weight = jax.random.uniform(k_w, (Cout, Cin, 1, 1), minval=-bound,
                                maxval=bound, dtype=jnp.float32)
    bias = jax.random.uniform(k_b, (Cout,), minval=-bound, maxval=bound,
                              dtype=jnp.float32)

    y = out_conv(x, weight, bias)
    jax.block_until_ready(y)
    y_ref = (jnp.einsum("nchw,oc->nohw", x, weight.reshape(Cout, Cin))
             + bias[None, :, None, None])
    assert y.shape == (N, Cout, S, S)
    assert jnp.allclose(y, y_ref, atol=1e-5, rtol=1e-5)

    # --- Wider-channel case (exercises the per-batch grid path). ---
    N2, Cin2, Cout2, S2 = 2, 8, 8, 16
    x2 = jax.random.normal(k_x2, (N2, Cin2, S2, S2), dtype=jnp.float32)
    bound2 = 1.0 / (Cin2 ** 0.5)
    w2 = jax.random.uniform(k_w2, (Cout2, Cin2), minval=-bound2, maxval=bound2,
                            dtype=jnp.float32)
    b2 = jax.random.uniform(k_b2, (Cout2,), minval=-bound2, maxval=bound2,
                            dtype=jnp.float32)

    y2 = out_conv(x2, w2, b2)
    jax.block_until_ready(y2)
    y2_ref = jnp.einsum("nchw,oc->nohw", x2, w2) + b2[None, :, None, None]
    assert y2.shape == (N2, Cout2, S2, S2)
    assert jnp.allclose(y2, y2_ref, atol=1e-5, rtol=1e-5)

    print("KERNEL_OK")
</pallas_src>

<mosaic_0001>
module attributes {stable_mosaic.version = 11 : i64} {
  func.func @_outconv_kernel(%arg0: i32, %arg1: memref<8x256xf32, #tpu.memory_space<vmem>>, %arg2: memref<6x8xf32, #tpu.memory_space<vmem>>, %arg3: memref<6x1xf32, #tpu.memory_space<vmem>>, %arg4: memref<6x256xf32, #tpu.memory_space<vmem>>) attributes {dimension_semantics = [#tpu.dimension_semantics<parallel>], iteration_bounds = array<i64: 1>, scalar_prefetch = 0 : i64, scratch_operands = 0 : i64, tpu.core_type = #tpu.core_type<tc>, window_params = [{transform_indices = @transform_0, window_bounds = array<i64: 8, 256>}, {pipeline_mode = #tpu.pipeline_mode<synchronous>, transform_indices = @transform_1, window_bounds = array<i64: 6, 8>}, {pipeline_mode = #tpu.pipeline_mode<synchronous>, transform_indices = @transform_2, window_bounds = array<i64: 6, 1>}, {transform_indices = @transform_3, window_bounds = array<i64: 6, 256>}]} {
    %c0 = arith.constant 0 : index
    %c0_0 = arith.constant 0 : index
    %0 = vector.load %arg2[%c0, %c0_0] : memref<6x8xf32, #tpu.memory_space<vmem>>, vector<6x8xf32>
    %c0_1 = arith.constant 0 : index
    %c0_2 = arith.constant 0 : index
    %1 = vector.load %arg1[%c0_1, %c0_2] : memref<8x256xf32, #tpu.memory_space<vmem>>, vector<8x256xf32>
    %cst = arith.constant dense<0.000000e+00> : vector<6x256xf32>
    %2 = tpu.matmul %0, %1, %cst {dimension_numbers = #tpu.dot_dimension_numbers<[1], [0], [0], [1], [0, 0, 1, 1], [], []>} : vector<6x8xf32>, vector<8x256xf32>, vector<6x256xf32> -> vector<6x256xf32>
    %c0_3 = arith.constant 0 : index
    %c0_4 = arith.constant 0 : index
    %3 = vector.load %arg3[%c0_3, %c0_4] : memref<6x1xf32, #tpu.memory_space<vmem>>, vector<6x1xf32>
    %4 = vector.broadcast %3 : vector<6x1xf32> to vector<6x256xf32>
    %5 = arith.addf %2, %4 : vector<6x256xf32>
    %c0_5 = arith.constant 0 : index
    %c0_6 = arith.constant 0 : index
    %6 = vector.load %arg4[%c0_5, %c0_6] : memref<6x256xf32, #tpu.memory_space<vmem>>, vector<6x256xf32>
    tpu.vector_store %arg4[%c0_5, %c0_6], %5 {strides = array<i32>} : memref<6x256xf32, #tpu.memory_space<vmem>>, vector<6x256xf32>,
    return
  }
  func.func @transform_0(%arg0: i32) -> (i32, i32) {
    %c0_i32 = arith.constant 0 : i32
    %c0_i32_0 = arith.constant 0 : i32
    return %c0_i32, %arg0 : i32, i32
  }
  func.func @transform_1(%arg0: i32) -> (i32, i32) {
    %c0_i32 = arith.constant 0 : i32
    %c0_i32_0 = arith.constant 0 : i32
    %c0_i32_1 = arith.constant 0 : i32
    return %c0_i32, %c0_i32_0 : i32, i32
  }
  func.func @transform_2(%arg0: i32) -> (i32, i32) {
    %c0_i32 = arith.constant 0 : i32
    %c0_i32_0 = arith.constant 0 : i32
    %c0_i32_1 = arith.constant 0 : i32
    return %c0_i32, %c0_i32_0 : i32, i32
  }
  func.func @transform_3(%arg0: i32) -> (i32, i32) {
    %c0_i32 = arith.constant 0 : i32
    %c0_i32_0 = arith.constant 0 : i32
    return %c0_i32, %arg0 : i32, i32
  }
}

</mosaic_0001>

<llo_original>
// kernel: tpu_custom_call.1
$region0: #{tpu_custom_call.1}
  #allocation0 [shape = 'u32[]', space=smem, size = 0x4, offset = 0x4, fixed_abs, tag = 'smem constant byte address 0x4 - core index']
  #allocation1 [shape = 'u32[144,128]{1,0:T(1,128)}', space=vmem, size = 0x12000, scoped, tag = 'internal scratch']
  %s0 = inlined_call_operand.hbm [shape: f32[8,256], index: 0, kind: input, shape index: {}]
  %s1 = inlined_call_operand.vmem [shape: f32[6,8], index: 1, kind: input, shape index: {}]
  %s2 = inlined_call_operand.vmem [shape: f32[6,1], index: 2, kind: input, shape index: {}]
  %s3 = inlined_call_operand.hbm [shape: f32[6,256], index: 3, kind: output, shape index: {}]
  %s4 = sld [smem:[#allocation0]]
  $region26: #{tpu_custom_call.1} parent=0
    _
  %s6 = ssub.s32 1, %s4
  %s7 = scalar_select 0, %s6, %s4
  $region1: #{tpu_custom_call.1} parent=0
    #allocation2 [shape = 'u8[8192]{0}', space=vmem, size = 0x2000, scoped, tag = 'input window, operand 0, single buffered']
    #allocation3 [shape = 's32[1]{0}', space=sflag, size = 0x4, scoped, tag = 'scoped memory for tpu_custom_call.1']
    #allocation4 [shape = 's32[1]{0}', space=sflag, size = 0x4, scoped, tag = 'scoped memory for tpu_custom_call.1']
    #allocation5 [shape = 'u8[8192]{0}', space=vmem, size = 0x2000, scoped, tag = 'output window, operand 0, single buffered']
    %8 = vsyncpa [#allocation3], 0
    %9 = vsyncpa [#allocation4], 0
    // Predicated region
    $region2: #{tpu_custom_call.1} parent=1 // pred_check
      _
    $region3: #{tpu_custom_call.1} parent=1 // pred_check_branch
      %11 = sbr.rel (0) target = $region5
    $region4: #{tpu_custom_call.1} parent=1 // pred_region
      %s13 = ssub.s32 256, 256
      %14 = vsyncadd [#allocation3], %s13
      %s16 = sshll.u32 [#allocation2], 4
      %s17 = int_to_ptr.vmem [resolvable:$true] %s16
      %19 = dma.hbm_to_vmem [thread:$0]  %s0, 256, %s17, [#allocation3]
    $region5: #{tpu_custom_call.1} parent=1 // pred_fallthru
      _
    // Predicated region
    $region6: #{tpu_custom_call.1} parent=1 // pred_check
      _
    $region7: #{tpu_custom_call.1} parent=1 // pred_check_branch
      %21 = sbr.rel (0) target = $region9
    $region8: #{tpu_custom_call.1} parent=1 // pred_region
      _
    $region9: #{tpu_custom_call.1} parent=1 // pred_fallthru
      _
    // Predicated region
    $region10: #{tpu_custom_call.1} parent=1 // pred_check
      _
    $region11: #{tpu_custom_call.1} parent=1 // pred_check_branch
      %23 = sbr.rel (0) target = $region13
    $region12: #{tpu_custom_call.1} parent=1 // pred_region
      _
    $region13: #{tpu_custom_call.1} parent=1 // pred_fallthru
      _
    // Predicated region
    $region14: #{tpu_custom_call.1} parent=1 // pred_check
      _
    $region15: #{tpu_custom_call.1} parent=1 // pred_check_branch
      %25 = sbr.rel (0) target = $region17
    $region16: #{tpu_custom_call.1} parent=1 // pred_region
      %26 = dma.done [#allocation3], 256
    $region17: #{tpu_custom_call.1} parent=1 // pred_fallthru
      _
    %v27 = vld [vmem:[%s1] sm:$0x3f]
    %v28 = vld [vmem:[#allocation2] sm:$0xff]
    %v29 = vld [vmem:[#allocation2 + $0x8] sm:$0xff]
    %v30 = vld [vmem:[%s2] sm:$0x3f]
    %32 = vset.pattern.permute.xlu0 0
    %33 = vperm.xlu0 %32, %v30
    %v34 = vpop.permute.xlu0 %33
    %vm36 = vcmask 64512
    %v38 = vsel %vm36, %v27, 0
    %40 = vmatprep.subr.mxu0 0.0
    %41 = vmatpush1.msra.mxu0 0.0
    %42 = vmatprep.subr.mxu0 0.0
    %43 = vmatpush1.msra.mxu0 0.0
    %44 = vmatprep.subr.mxu0 0.0
    %45 = vmatpush1.msra.mxu0 0.0
    %46 = vmatprep.subr.mxu0 0.0
    %47 = vmatpush1.msra.mxu0 0.0
    %48 = vmatprep.subr.mxu0 0.0
    %49 = vmatpush1.msra.mxu0 0.0
    %50 = vmatprep.subr.mxu0 0.0
    %51 = vmatpush1.msra.mxu0 0.0
    %52 = vmatprep.subr.mxu0 0.0
    %53 = vmatpush1.msra.mxu0 0.0
    %54 = vmatprep.subr.mxu0 0.0
    %55 = vmatpush1.msra.mxu0 0.0
    %56 = vmatprep.subr.mxu0 0.0
    %57 = vmatpush1.msra.mxu0 0.0
    %58 = vmatprep.subr.mxu0 0.0
    %59 = vmatpush1.msra.mxu0 0.0
    %60 = vmatprep.subr.mxu0 0.0
    %61 = vmatpush1.msra.mxu0 0.0
    %62 = vmatprep.subr.mxu0 0.0
    %63 = vmatpush1.msra.mxu0 0.0
    %64 = vmatprep.subr.mxu0 0.0
    %65 = vmatpush1.msra.mxu0 0.0
    %66 = vmatprep.subr.mxu0 0.0
    %67 = vmatpush1.msra.mxu0 0.0
    %68 = vmatprep.subr.mxu0 0.0
    %69 = vmatpush1.msra.mxu0 0.0
    %70 = vmatprep.subr.mxu0 %v29
    %71 = vmatpush1.msra.mxu0 %v28
    %72 = vmatprep.subr.mxu0 0.0
    %73 = vmatpush2.msra.mxu0 0.0
    %74 = vmatprep.subr.mxu0 0.0
    %75 = vmatpush2.msra.mxu0 0.0
    %76 = vmatprep.subr.mxu0 0.0
    %77 = vmatpush2.msra.mxu0 0.0
    %78 = vmatprep.subr.mxu0 0.0
    %79 = vmatpush2.msra.mxu0 0.0
    %80 = vmatprep.subr.mxu0 0.0
    %81 = vmatpush2.msra.mxu0 0.0
    %82 = vmatprep.subr.mxu0 0.0
    %83 = vmatpush2.msra.mxu0 0.0
    %84 = vmatprep.subr.mxu0 0.0
    %85 = vmatpush2.msra.mxu0 0.0
    %86 = vmatprep.subr.mxu0 0.0
    %87 = vmatpush2.msra.mxu0 0.0
    %88 = vmatprep.subr.mxu0 0.0
    %89 = vmatpush2.msra.mxu0 0.0
    %90 = vmatprep.subr.mxu0 0.0
    %91 = vmatpush2.msra.mxu0 0.0
    %92 = vmatprep.subr.mxu0 0.0
    %93 = vmatpush2.msra.mxu0 0.0
    %94 = vmatprep.subr.mxu0 0.0
    %95 = vmatpush2.msra.mxu0 0.0
    %96 = vmatprep.subr.mxu0 0.0
    %97 = vmatpush2.msra.mxu0 0.0
    %98 = vmatprep.subr.mxu0 0.0
    %99 = vmatpush2.msra.mxu0 0.0
    %100 = vmatprep.subr.mxu0 0.0
    %101 = vmatpush2.msra.mxu0 0.0
    %102 = vmatprep.subr.mxu0 0.0
    %103 = vmatpush2.msra.mxu0 0.0
    %104 = vmatprep.mubr.f32.mxu0 0.0
    %105 = vmatmul.mubr.f32.gmra.mxu0 %v38
    %v106 = vpop.f32.mrf.mxu0
    %v107 = vadd.f32 %v34, %v106
    %v108 = vpop.f32.mrf.mxu0
    %v109 = vadd.f32 %v34, %v108
    %110 = vdwg.mxu0
    %111 = vst [vmem:[#allocation5] sm:$0x3f] %v107
    %112 = vst [vmem:[#allocation5 + $0x8] sm:$0x3f] %v109
    // Predicated region
    $region18: #{tpu_custom_call.1} parent=1 // pred_check
      _
    $region19: #{tpu_custom_call.1} parent=1 // pred_check_branch
      %114 = sbr.rel (0) target = $region21
    $region20: #{tpu_custom_call.1} parent=1 // pred_region
      %s116 = ssub.s32 256, 256
      %117 = vsyncadd [#allocation4], %s116
      %s119 = sshll.u32 [#allocation5], 4
      %s120 = int_to_ptr.vmem [resolvable:$true] %s119
      %122 = dma.vmem_to_hbm [thread:$0]  %s120, 256, %s3, [#allocation4]
    $region21: #{tpu_custom_call.1} parent=1 // pred_fallthru
      _
    // Predicated region
    $region22: #{tpu_custom_call.1} parent=1 // pred_check
      _
    $region23: #{tpu_custom_call.1} parent=1 // pred_check_branch
      %124 = sbr.rel (0) target = $region25
    $region24: #{tpu_custom_call.1} parent=1 // pred_region
      %125 = dma.done [#allocation4], 256
    $region25: #{tpu_custom_call.1} parent=1 // pred_fallthru
      _
    %126 = vsyncpa [#allocation3], 1
    %127 = vsyncpa [#allocation4], 1

</llo_original>
